<compile_context>
chip_gen: v7x
topology: tpu7x:2x2x1
jax: 0.10.0
libtpu: 0.0.40
codegen_flags: <defaults>
</compile_context>

<pallas_src>
import jax
import jax.numpy as jnp
from jax.experimental import pallas as pl
from jax.experimental.pallas import tpu as pltpu

_SLOPE = 0.2


def _leaky_relu(x, slope=_SLOPE):
    # Equivalent to where(x>=0, x, slope*x) for 0 < slope < 1; one VPU op fewer.
    return jnp.maximum(x, slope * x)


def _leaky_relu_ref(x, slope=_SLOPE):
    return jnp.where(x >= 0, x, slope * x)


def _round_up(n, m):
    return ((n + m - 1) // m) * m


def discriminator_kernel(xt_ref, w1_ref, b1_ref, w2_ref, b2_ref, w3_ref, b3_ref, o_ref):
    """Fused feature-major forward for one batch-column tile.

    xt_ref : (2, TB)  f32   x^T, streamed per grid step
    w1_ref : (H, 2)   f32   fc1 weight (out, in)       -- resident
    b1_ref : (H, 1)   f32
    w2_ref : (H, H)   bf16  fc2 weight (out, in)       -- resident
    b2_ref : (H, 1)   f32
    w3_ref : (1, H)   bf16  fc3 weight (out, in)       -- resident
    b3_ref : (1, 1)   f32
    o_ref  : (1, TB)  f32   lane-dense output row
    """
    xt = xt_ref[...]                                         # (2, TB) f32
    w1 = w1_ref[...]                                         # (H, 2) f32

    # fc1: K=2 contraction -> two broadcast FMAs on the VPU (skip the MXU).
    # TODO(synk): if a bundle dump shows XLU/VPU binding on a given chip, move
    # this onto the MXU as a bf16 (H,2)@(2,TB) dot instead (MXU has slack).
    h1 = w1[:, 0:1] * xt[0:1, :] + w1[:, 1:2] * xt[1:2, :] + b1_ref[...]
    h1 = _leaky_relu(h1)                                     # (H, TB) f32

    # fc2: dominant FLOPs -> bf16 MXU matmul with f32 accumulation; activation
    # math stays f32 on the VPU.
    h2 = jnp.dot(w2_ref[...], h1.astype(jnp.bfloat16),
                 preferred_element_type=jnp.float32) + b2_ref[...]
    h2 = _leaky_relu(h2)                                     # (H, TB) f32

    # fc3: (1,H)@(H,TB) on the MXU -> lane-dense (1,TB) result, no cross-lane
    # XLU reduce and no full-slab VPU multiply.
    h3 = jnp.dot(w3_ref[...], h2.astype(jnp.bfloat16),
                 preferred_element_type=jnp.float32) + b3_ref[...]
    h3 = _leaky_relu(h3)                                     # (1, TB) f32

    # Lane-dense store: dense vst + contiguous HBM writeback; sigmoid runs on
    # dense vregs through the EUP.
    o_ref[...] = jax.nn.sigmoid(h3)


def discriminator_forward(x, params, *, batch_tile=2048):
    """x: (B, 2) f32 -> (B, 1) f32."""
    w1, b1, w2, b2, w3, b3 = params
    B, in_size = x.shape
    H = w1.shape[0]
    out_size = w3.shape[0]
    assert in_size == 2, "kernel specialized for input_size=2"
    assert out_size == 1, "kernel specialized for output_size=1"

    # Batch lives on the lane axis -> pad to a multiple of 128.
    b128 = _round_up(B, 128)
    tb = min(batch_tile, b128)
    if b128 >= 256:
        # Keep >= 2 grid steps so the "parallel" axis can shard across the two
        # TensorCores on v7x (inert on v5e/v6e single-TC parts).
        tb = min(tb, max(128, (b128 // 2 // 128) * 128))
    b_pad = _round_up(B, tb)

    # Feature-major layout: columns are batch rows. Padded columns are zero
    # (produce sigmoid(0)=0.5 garbage, sliced off below).
    xt = x.T
    if b_pad != B:
        xt = jnp.pad(xt, ((0, 0), (0, b_pad - B)))

    w2_bf16 = w2.astype(jnp.bfloat16)          # halve resident weight VMEM/DMA
    w3_bf16 = w3.astype(jnp.bfloat16)

    const = lambda i: (0, 0)

    out = pl.pallas_call(
        discriminator_kernel,
        out_shape=jax.ShapeDtypeStruct((out_size, b_pad), jnp.float32),
        grid=(b_pad // tb,),
        in_specs=[
            pl.BlockSpec((in_size, tb), lambda i: (0, i)),   # x^T: streamed tile
            pl.BlockSpec((H, in_size), const),               # W1 resident
            pl.BlockSpec((H, 1), const),                     # b1
            pl.BlockSpec((H, H), const),                     # W2 (bf16) resident
            pl.BlockSpec((H, 1), const),                     # b2
            pl.BlockSpec((out_size, H), const),              # W3 (bf16)
            pl.BlockSpec((out_size, 1), const),              # b3
        ],
        out_specs=pl.BlockSpec((out_size, tb), lambda i: (0, i)),
        compiler_params=pltpu.CompilerParams(
            dimension_semantics=("parallel",),               # megacore on v7x
            vmem_limit_bytes=32 * 1024 * 1024,
        ),
    )(xt, w1, b1, w2_bf16, b2, w3_bf16, b3)

    # (1, b_pad) -> (B, 1)
    return out.T[:B]


def init_params(key, input_size=2, output_size=1, hidden_size=128):
    """Kaiming-normal weights (fan_in mode, gain=sqrt(2)), zero biases.

    Stored in PyTorch layout: weights (out_features, in_features), biases as
    (out_features, 1) columns (the transposed forward uses them directly).
    """
    k1, k2, k3 = jax.random.split(key, 3)

    def kaiming(k, fan_out, fan_in):
        std = jnp.sqrt(2.0 / fan_in)
        return jax.random.normal(k, (fan_out, fan_in), jnp.float32) * std

    w1 = kaiming(k1, hidden_size, input_size)        # (H, 2)
    b1 = jnp.zeros((hidden_size, 1), jnp.float32)
    w2 = kaiming(k2, hidden_size, hidden_size)       # (H, H)
    b2 = jnp.zeros((hidden_size, 1), jnp.float32)
    w3 = kaiming(k3, output_size, hidden_size)       # (1, H)
    b3 = jnp.zeros((output_size, 1), jnp.float32)
    return (w1, b1, w2, b2, w3, b3)


def reference_forward(x, params):
    """Pure-JAX f32 reference mirroring the PyTorch forward (batch-major)."""
    w1, b1, w2, b2, w3, b3 = params
    h = _leaky_relu_ref(x @ w1.T + b1.T)
    h = _leaky_relu_ref(h @ w2.T + b2.T)
    h = _leaky_relu_ref(h @ w3.T + b3.T)
    return jax.nn.sigmoid(h)


if __name__ == "__main__":
    key = jax.random.PRNGKey(0)
    kx, kp = jax.random.split(key)

    # Small shapes; batch deliberately NOT a multiple of 128 to exercise padding.
    batch, input_size, hidden_size, output_size = 10, 2, 128, 1
    x = jax.random.normal(kx, (batch, input_size), jnp.float32)
    params = init_params(kp, input_size, output_size, hidden_size)

    out = discriminator_forward(x, params)
    out = jax.block_until_ready(out)

    ref = reference_forward(x, params)
    assert out.shape == (batch, output_size)
    # fc2/fc3 run in bf16 on the MXU -> allow ~1e-2-level drift vs f32 reference.
    assert jnp.allclose(out, ref, atol=2e-2, rtol=2e-2), "mismatch vs reference"

    print("KERNEL_OK")
</pallas_src>

<mosaic_0001>
module attributes {stable_mosaic.version = 11 : i64} {
  func.func @discriminator_kernel(%arg0: i32, %arg1: memref<2x128xf32, #tpu.memory_space<vmem>>, %arg2: memref<128x2xf32, #tpu.memory_space<vmem>>, %arg3: memref<128x1xf32, #tpu.memory_space<vmem>>, %arg4: memref<128x128xbf16, #tpu.memory_space<vmem>>, %arg5: memref<128x1xf32, #tpu.memory_space<vmem>>, %arg6: memref<1x128xbf16, #tpu.memory_space<vmem>>, %arg7: memref<1x1xf32, #tpu.memory_space<vmem>>, %arg8: memref<1x128xf32, #tpu.memory_space<vmem>>) attributes {dimension_semantics = [#tpu.dimension_semantics<parallel>], iteration_bounds = array<i64: 1>, scalar_prefetch = 0 : i64, scratch_operands = 0 : i64, tpu.core_type = #tpu.core_type<tc>, window_params = [{transform_indices = @transform_0, window_bounds = array<i64: 2, 128>}, {pipeline_mode = #tpu.pipeline_mode<synchronous>, transform_indices = @transform_1, window_bounds = array<i64: 128, 2>}, {pipeline_mode = #tpu.pipeline_mode<synchronous>, transform_indices = @transform_2, window_bounds = array<i64: 128, 1>}, {pipeline_mode = #tpu.pipeline_mode<synchronous>, transform_indices = @transform_3, window_bounds = array<i64: 128, 128>}, {pipeline_mode = #tpu.pipeline_mode<synchronous>, transform_indices = @transform_4, window_bounds = array<i64: 128, 1>}, {pipeline_mode = #tpu.pipeline_mode<synchronous>, transform_indices = @transform_5, window_bounds = array<i64: 1, 128>}, {pipeline_mode = #tpu.pipeline_mode<synchronous>, transform_indices = @transform_6, window_bounds = array<i64: 1, 1>}, {transform_indices = @transform_7, window_bounds = array<i64: 1, 128>}]} {
    %c0 = arith.constant 0 : index
    %c0_0 = arith.constant 0 : index
    %0 = vector.load %arg1[%c0, %c0_0] : memref<2x128xf32, #tpu.memory_space<vmem>>, vector<2x128xf32>
    %c0_1 = arith.constant 0 : index
    %c0_2 = arith.constant 0 : index
    %1 = vector.load %arg2[%c0_1, %c0_2] : memref<128x2xf32, #tpu.memory_space<vmem>>, vector<128x2xf32>
    %2 = vector.extract_strided_slice %1 {offsets = [0, 0], sizes = [128, 1], strides = [1, 1]} : vector<128x2xf32> to vector<128x1xf32>
    %3 = vector.extract_strided_slice %0 {offsets = [0, 0], sizes = [1, 128], strides = [1, 1]} : vector<2x128xf32> to vector<1x128xf32>
    %4 = vector.broadcast %2 : vector<128x1xf32> to vector<128x128xf32>
    %5 = vector.broadcast %3 : vector<1x128xf32> to vector<128x128xf32>
    %6 = arith.mulf %4, %5 : vector<128x128xf32>
    %7 = vector.extract_strided_slice %1 {offsets = [0, 1], sizes = [128, 1], strides = [1, 1]} : vector<128x2xf32> to vector<128x1xf32>
    %8 = vector.extract_strided_slice %0 {offsets = [1, 0], sizes = [1, 128], strides = [1, 1]} : vector<2x128xf32> to vector<1x128xf32>
    %9 = vector.broadcast %7 : vector<128x1xf32> to vector<128x128xf32>
    %10 = vector.broadcast %8 : vector<1x128xf32> to vector<128x128xf32>
    %11 = arith.mulf %9, %10 : vector<128x128xf32>
    %12 = arith.addf %6, %11 : vector<128x128xf32>
    %c0_3 = arith.constant 0 : index
    %c0_4 = arith.constant 0 : index
    %13 = vector.load %arg3[%c0_3, %c0_4] : memref<128x1xf32, #tpu.memory_space<vmem>>, vector<128x1xf32>
    %14 = vector.broadcast %13 : vector<128x1xf32> to vector<128x128xf32>
    %15 = arith.addf %12, %14 : vector<128x128xf32>
    %cst = arith.constant 2.000000e-01 : f32
    %16 = vector.broadcast %cst : f32 to vector<128x128xf32>
    %17 = arith.mulf %16, %15 : vector<128x128xf32>
    %18 = arith.maximumf %15, %17 : vector<128x128xf32>
    %c0_5 = arith.constant 0 : index
    %c0_6 = arith.constant 0 : index
    %19 = vector.load %arg4[%c0_5, %c0_6] : memref<128x128xbf16, #tpu.memory_space<vmem>>, vector<128x128xbf16>
    %20 = arith.truncf %18 : vector<128x128xf32> to vector<128x128xbf16>
    %cst_7 = arith.constant dense<0.000000e+00> : vector<128x128xf32>
    %21 = tpu.matmul %19, %20, %cst_7 {dimension_numbers = #tpu.dot_dimension_numbers<[1], [0], [0], [1], [0, 0, 1, 1], [], []>} : vector<128x128xbf16>, vector<128x128xbf16>, vector<128x128xf32> -> vector<128x128xf32>
    %c0_8 = arith.constant 0 : index
    %c0_9 = arith.constant 0 : index
    %22 = vector.load %arg5[%c0_8, %c0_9] : memref<128x1xf32, #tpu.memory_space<vmem>>, vector<128x1xf32>
    %23 = vector.broadcast %22 : vector<128x1xf32> to vector<128x128xf32>
    %24 = arith.addf %21, %23 : vector<128x128xf32>
    %cst_10 = arith.constant 2.000000e-01 : f32
    %25 = vector.broadcast %cst_10 : f32 to vector<128x128xf32>
    %26 = arith.mulf %25, %24 : vector<128x128xf32>
    %27 = arith.maximumf %24, %26 : vector<128x128xf32>
    %c0_11 = arith.constant 0 : index
    %c0_12 = arith.constant 0 : index
    %28 = vector.load %arg6[%c0_11, %c0_12] : memref<1x128xbf16, #tpu.memory_space<vmem>>, vector<1x128xbf16>
    %29 = arith.truncf %27 : vector<128x128xf32> to vector<128x128xbf16>
    %cst_13 = arith.constant dense<0.000000e+00> : vector<1x128xf32>
    %30 = tpu.matmul %28, %29, %cst_13 {dimension_numbers = #tpu.dot_dimension_numbers<[1], [0], [0], [1], [0, 0, 1, 1], [], []>} : vector<1x128xbf16>, vector<128x128xbf16>, vector<1x128xf32> -> vector<1x128xf32>
    %c0_14 = arith.constant 0 : index
    %c0_15 = arith.constant 0 : index
    %31 = vector.load %arg7[%c0_14, %c0_15] : memref<1x1xf32, #tpu.memory_space<vmem>>, vector<1x1xf32>
    %32 = vector.broadcast %31 : vector<1x1xf32> to vector<1x128xf32>
    %33 = arith.addf %30, %32 : vector<1x128xf32>
    %cst_16 = arith.constant 2.000000e-01 : f32
    %34 = vector.broadcast %cst_16 : f32 to vector<1x128xf32>
    %35 = arith.mulf %34, %33 : vector<1x128xf32>
    %36 = arith.maximumf %33, %35 : vector<1x128xf32>
    %37 = arith.negf %36 : vector<1x128xf32>
    %38 = math.exp %37 : vector<1x128xf32>
    %cst_17 = arith.constant 1.000000e+00 : f32
    %39 = vector.broadcast %cst_17 : f32 to vector<1x128xf32>
    %40 = arith.addf %39, %38 : vector<1x128xf32>
    %41 = arith.divf %39, %40 : vector<1x128xf32>
    %c0_18 = arith.constant 0 : index
    %c0_19 = arith.constant 0 : index
    %42 = vector.load %arg8[%c0_18, %c0_19] : memref<1x128xf32, #tpu.memory_space<vmem>>, vector<1x128xf32>
    tpu.vector_store %arg8[%c0_18, %c0_19], %41 {strides = array<i32>} : memref<1x128xf32, #tpu.memory_space<vmem>>, vector<1x128xf32>,
    return
  }
  func.func @transform_0(%arg0: i32) -> (i32, i32) {
    %c0_i32 = arith.constant 0 : i32
    %c0_i32_0 = arith.constant 0 : i32
    return %c0_i32, %arg0 : i32, i32
  }
  func.func @transform_1(%arg0: i32) -> (i32, i32) {
    %c0_i32 = arith.constant 0 : i32
    %c0_i32_0 = arith.constant 0 : i32
    %c0_i32_1 = arith.constant 0 : i32
    return %c0_i32, %c0_i32_0 : i32, i32
  }
  func.func @transform_2(%arg0: i32) -> (i32, i32) {
    %c0_i32 = arith.constant 0 : i32
    %c0_i32_0 = arith.constant 0 : i32
    %c0_i32_1 = arith.constant 0 : i32
    return %c0_i32, %c0_i32_0 : i32, i32
  }
  func.func @transform_3(%arg0: i32) -> (i32, i32) {
    %c0_i32 = arith.constant 0 : i32
    %c0_i32_0 = arith.constant 0 : i32
    %c0_i32_1 = arith.constant 0 : i32
    return %c0_i32, %c0_i32_0 : i32, i32
  }
  func.func @transform_4(%arg0: i32) -> (i32, i32) {
    %c0_i32 = arith.constant 0 : i32
    %c0_i32_0 = arith.constant 0 : i32
    %c0_i32_1 = arith.constant 0 : i32
    return %c0_i32, %c0_i32_0 : i32, i32
  }
  func.func @transform_5(%arg0: i32) -> (i32, i32) {
    %c0_i32 = arith.constant 0 : i32
    %c0_i32_0 = arith.constant 0 : i32
    %c0_i32_1 = arith.constant 0 : i32
    return %c0_i32, %c0_i32_0 : i32, i32
  }
  func.func @transform_6(%arg0: i32) -> (i32, i32) {
    %c0_i32 = arith.constant 0 : i32
    %c0_i32_0 = arith.constant 0 : i32
    %c0_i32_1 = arith.constant 0 : i32
    return %c0_i32, %c0_i32_0 : i32, i32
  }
  func.func @transform_7(%arg0: i32) -> (i32, i32) {
    %c0_i32 = arith.constant 0 : i32
    %c0_i32_0 = arith.constant 0 : i32
    return %c0_i32, %arg0 : i32, i32
  }
}

</mosaic_0001>

<llo_original>
// kernel: tpu_custom_call.1
$region0: #{tpu_custom_call.1}
  #allocation0 [shape = 'u32[]', space=smem, size = 0x4, offset = 0x4, fixed_abs, tag = 'smem constant byte address 0x4 - core index']
  #allocation1 [shape = 'u32[144,128]{1,0:T(1,128)}', space=vmem, size = 0x12000, scoped, tag = 'internal scratch']
  #allocation2 [shape = 'f32[1,1]{1,0:T(1,128)S(1)}', space=vmem, size = 0x200, scoped, tag = 'scoped memory for tpu_custom_call.1']
  %s0 = inlined_call_operand.vmem [shape: f32[2,128], index: 0, kind: input, shape index: {}]
  %s1 = inlined_call_operand.vmem [shape: f32[128,2], index: 1, kind: input, shape index: {}]
  %s2 = inlined_call_operand.vmem [shape: f32[128,1], index: 2, kind: input, shape index: {}]
  %s3 = inlined_call_operand.vmem [shape: bf16[128,128], index: 3, kind: input, shape index: {}]
  %s4 = inlined_call_operand.vmem [shape: f32[128,1], index: 4, kind: input, shape index: {}]
  %s5 = inlined_call_operand.vmem [shape: bf16[1,128], index: 5, kind: input, shape index: {}]
  %s6 = inlined_call_operand.<no memory space> [shape: f32[1,1], index: 6, kind: input, shape index: {}]
  %s7 = inlined_call_operand.hbm [shape: f32[1,128], index: 7, kind: output, shape index: {}]
  %s8 = sld [smem:[#allocation0]]
  $region38: #{tpu_custom_call.1} parent=0
    _
  %s10 = ssub.s32 1, %s8
  %s11 = scalar_select 0, %s10, %s8
  %v12 = vstv %s6
  %13 = vst [vmem:[#allocation2] sm:$0x1] %v12
  $region1: #{tpu_custom_call.1} parent=0
    #allocation3 [shape = 'u8[512]{0}', space=vmem, size = 0x400, scoped, tag = 'output window, operand 0, single buffered']
    #allocation4 [shape = 's32[1]{0}', space=sflag, size = 0x4, scoped, tag = 'scoped memory for tpu_custom_call.1']
    %14 = vsyncpa [#allocation4], 0
    // Predicated region
    $region2: #{tpu_custom_call.1} parent=1 // pred_check
      _
    $region3: #{tpu_custom_call.1} parent=1 // pred_check_branch
      %16 = sbr.rel (0) target = $region5
    $region4: #{tpu_custom_call.1} parent=1 // pred_region
      _
    $region5: #{tpu_custom_call.1} parent=1 // pred_fallthru
      _
    // Predicated region
    $region6: #{tpu_custom_call.1} parent=1 // pred_check
      _
    $region7: #{tpu_custom_call.1} parent=1 // pred_check_branch
      %18 = sbr.rel (0) target = $region9
    $region8: #{tpu_custom_call.1} parent=1 // pred_region
      _
    $region9: #{tpu_custom_call.1} parent=1 // pred_fallthru
      _
    // Predicated region
    $region10: #{tpu_custom_call.1} parent=1 // pred_check
      _
    $region11: #{tpu_custom_call.1} parent=1 // pred_check_branch
      %20 = sbr.rel (0) target = $region13
    $region12: #{tpu_custom_call.1} parent=1 // pred_region
      _
    $region13: #{tpu_custom_call.1} parent=1 // pred_fallthru
      _
    // Predicated region
    $region14: #{tpu_custom_call.1} parent=1 // pred_check
      _
    $region15: #{tpu_custom_call.1} parent=1 // pred_check_branch
      %22 = sbr.rel (0) target = $region17
    $region16: #{tpu_custom_call.1} parent=1 // pred_region
      _
    $region17: #{tpu_custom_call.1} parent=1 // pred_fallthru
      _
    // Predicated region
    $region18: #{tpu_custom_call.1} parent=1 // pred_check
      _
    $region19: #{tpu_custom_call.1} parent=1 // pred_check_branch
      %24 = sbr.rel (0) target = $region21
    $region20: #{tpu_custom_call.1} parent=1 // pred_region
      _
    $region21: #{tpu_custom_call.1} parent=1 // pred_fallthru
      _
    // Predicated region
    $region22: #{tpu_custom_call.1} parent=1 // pred_check
      _
    $region23: #{tpu_custom_call.1} parent=1 // pred_check_branch
      %26 = sbr.rel (0) target = $region25
    $region24: #{tpu_custom_call.1} parent=1 // pred_region
      _
    $region25: #{tpu_custom_call.1} parent=1 // pred_fallthru
      _
    // Predicated region
    $region26: #{tpu_custom_call.1} parent=1 // pred_check
      _
    $region27: #{tpu_custom_call.1} parent=1 // pred_check_branch
      %28 = sbr.rel (0) target = $region29
    $region28: #{tpu_custom_call.1} parent=1 // pred_region
      _
    $region29: #{tpu_custom_call.1} parent=1 // pred_fallthru
      _
    %v30 = vld [vmem:[%s0] sm:$0x3]
    %v31 = vld [vmem:[%s1] sm:$0xff]
    %v32 = vld [vmem:[%s1 + $0x8] sm:$0xff]
    %v33 = vld [vmem:[%s1 + $0x10] sm:$0xff]
    %v34 = vld [vmem:[%s1 + $0x18] sm:$0xff]
    %v35 = vld [vmem:[%s1 + $0x20] sm:$0xff]
    %v36 = vld [vmem:[%s1 + $0x28] sm:$0xff]
    %v37 = vld [vmem:[%s1 + $0x30] sm:$0xff]
    %v38 = vld [vmem:[%s1 + $0x38] sm:$0xff]
    %v39 = vld [vmem:[%s1 + $0x40] sm:$0xff]
    %v40 = vld [vmem:[%s1 + $0x48] sm:$0xff]
    %v41 = vld [vmem:[%s1 + $0x50] sm:$0xff]
    %v42 = vld [vmem:[%s1 + $0x58] sm:$0xff]
    %v43 = vld [vmem:[%s1 + $0x60] sm:$0xff]
    %v44 = vld [vmem:[%s1 + $0x68] sm:$0xff]
    %v45 = vld [vmem:[%s1 + $0x70] sm:$0xff]
    %v46 = vld [vmem:[%s1 + $0x78] sm:$0xff]
    %48 = vset.pattern.permute.xlu0 0
    %49 = vperm.xlu0 %48, %v31
    %v50 = vpop.permute.xlu0 %49
    %53 = vset.pattern.permute.xlu0 0
    %54 = vperm.xlu0 %53, %v32
    %v55 = vpop.permute.xlu0 %54
    %58 = vset.pattern.permute.xlu0 0
    %59 = vperm.xlu0 %58, %v33
    %v60 = vpop.permute.xlu0 %59
    %63 = vset.pattern.permute.xlu0 0
    %64 = vperm.xlu0 %63, %v34
    %v65 = vpop.permute.xlu0 %64
    %68 = vset.pattern.permute.xlu0 0
    %69 = vperm.xlu0 %68, %v35
    %v70 = vpop.permute.xlu0 %69
    %73 = vset.pattern.permute.xlu0 0
    %74 = vperm.xlu0 %73, %v36
    %v75 = vpop.permute.xlu0 %74
    %78 = vset.pattern.permute.xlu0 0
    %79 = vperm.xlu0 %78, %v37
    %v80 = vpop.permute.xlu0 %79
    %83 = vset.pattern.permute.xlu0 0
    %84 = vperm.xlu0 %83, %v38
    %v85 = vpop.permute.xlu0 %84
    %88 = vset.pattern.permute.xlu0 0
    %89 = vperm.xlu0 %88, %v39
    %v90 = vpop.permute.xlu0 %89
    %93 = vset.pattern.permute.xlu0 0
    %94 = vperm.xlu0 %93, %v40
    %v95 = vpop.permute.xlu0 %94
    %98 = vset.pattern.permute.xlu0 0
    %99 = vperm.xlu0 %98, %v41
    %v100 = vpop.permute.xlu0 %99
    %103 = vset.pattern.permute.xlu0 0
    %104 = vperm.xlu0 %103, %v42
    %v105 = vpop.permute.xlu0 %104
    %108 = vset.pattern.permute.xlu0 0
    %109 = vperm.xlu0 %108, %v43
    %v110 = vpop.permute.xlu0 %109
    %113 = vset.pattern.permute.xlu0 0
    %114 = vperm.xlu0 %113, %v44
    %v115 = vpop.permute.xlu0 %114
    %118 = vset.pattern.permute.xlu0 0
    %119 = vperm.xlu0 %118, %v45
    %v120 = vpop.permute.xlu0 %119
    %123 = vset.pattern.permute.xlu0 0
    %124 = vperm.xlu0 %123, %v46
    %v125 = vpop.permute.xlu0 %124
    %v127 = vlaneseq
    %v128 = vshrl.u32 %v127, 7
    %v129 = vsub.s32 0, %v128
    %v130 = vrot.slane %v30, %v129
    %v131 = vmul.f32 %v50, %v130
    %v132 = vmul.f32 %v55, %v130
    %v133 = vmul.f32 %v60, %v130
    %v134 = vmul.f32 %v65, %v130
    %v135 = vmul.f32 %v70, %v130
    %v136 = vmul.f32 %v75, %v130
    %v137 = vmul.f32 %v80, %v130
    %v138 = vmul.f32 %v85, %v130
    %v139 = vmul.f32 %v90, %v130
    %v140 = vmul.f32 %v95, %v130
    %v141 = vmul.f32 %v100, %v130
    %v142 = vmul.f32 %v105, %v130
    %v143 = vmul.f32 %v110, %v130
    %v144 = vmul.f32 %v115, %v130
    %v145 = vmul.f32 %v120, %v130
    %v146 = vmul.f32 %v125, %v130
    %147 = vset.pattern.permute.xlu0 1
    %148 = vperm.xlu0 %147, %v31
    %v149 = vpop.permute.xlu0 %148
    %151 = vset.pattern.permute.xlu0 1
    %152 = vperm.xlu0 %151, %v32
    %v153 = vpop.permute.xlu0 %152
    %155 = vset.pattern.permute.xlu0 1
    %156 = vperm.xlu0 %155, %v33
    %v157 = vpop.permute.xlu0 %156
    %159 = vset.pattern.permute.xlu0 1
    %160 = vperm.xlu0 %159, %v34
    %v161 = vpop.permute.xlu0 %160
    %163 = vset.pattern.permute.xlu0 1
    %164 = vperm.xlu0 %163, %v35
    %v165 = vpop.permute.xlu0 %164
    %167 = vset.pattern.permute.xlu0 1
    %168 = vperm.xlu0 %167, %v36
    %v169 = vpop.permute.xlu0 %168
    %171 = vset.pattern.permute.xlu0 1
    %172 = vperm.xlu0 %171, %v37
    %v173 = vpop.permute.xlu0 %172
    %175 = vset.pattern.permute.xlu0 1
    %176 = vperm.xlu0 %175, %v38
    %v177 = vpop.permute.xlu0 %176
    %179 = vset.pattern.permute.xlu0 1
    %180 = vperm.xlu0 %179, %v39
    %v181 = vpop.permute.xlu0 %180
    %183 = vset.pattern.permute.xlu0 1
    %184 = vperm.xlu0 %183, %v40
    %v185 = vpop.permute.xlu0 %184
    %187 = vset.pattern.permute.xlu0 1
    %188 = vperm.xlu0 %187, %v41
    %v189 = vpop.permute.xlu0 %188
    %191 = vset.pattern.permute.xlu0 1
    %192 = vperm.xlu0 %191, %v42
    %v193 = vpop.permute.xlu0 %192
    %195 = vset.pattern.permute.xlu0 1
    %196 = vperm.xlu0 %195, %v43
    %v197 = vpop.permute.xlu0 %196
    %199 = vset.pattern.permute.xlu0 1
    %200 = vperm.xlu0 %199, %v44
    %v201 = vpop.permute.xlu0 %200
    %203 = vset.pattern.permute.xlu0 1
    %204 = vperm.xlu0 %203, %v45
    %v205 = vpop.permute.xlu0 %204
    %207 = vset.pattern.permute.xlu0 1
    %208 = vperm.xlu0 %207, %v46
    %v209 = vpop.permute.xlu0 %208
    %v211 = vlaneseq
    %v212 = vshrl.u32 %v211, 7
    %v213 = vsub.s32 1, %v212
    %v214 = vrot.slane %v30, %v213
    %v215 = vmul.f32 %v149, %v214
    %v216 = vmul.f32 %v153, %v214
    %v217 = vmul.f32 %v157, %v214
    %v218 = vmul.f32 %v161, %v214
    %v219 = vmul.f32 %v165, %v214
    %v220 = vmul.f32 %v169, %v214
    %v221 = vmul.f32 %v173, %v214
    %v222 = vmul.f32 %v177, %v214
    %v223 = vmul.f32 %v181, %v214
    %v224 = vmul.f32 %v185, %v214
    %v225 = vmul.f32 %v189, %v214
    %v226 = vmul.f32 %v193, %v214
    %v227 = vmul.f32 %v197, %v214
    %v228 = vmul.f32 %v201, %v214
    %v229 = vmul.f32 %v205, %v214
    %v230 = vmul.f32 %v209, %v214
    %v231 = vadd.f32 %v131, %v215
    %v232 = vadd.f32 %v132, %v216
    %v233 = vadd.f32 %v133, %v217
    %v234 = vadd.f32 %v134, %v218
    %v235 = vadd.f32 %v135, %v219
    %v236 = vadd.f32 %v136, %v220
    %v237 = vadd.f32 %v137, %v221
    %v238 = vadd.f32 %v138, %v222
    %v239 = vadd.f32 %v139, %v223
    %v240 = vadd.f32 %v140, %v224
    %v241 = vadd.f32 %v141, %v225
    %v242 = vadd.f32 %v142, %v226
    %v243 = vadd.f32 %v143, %v227
    %v244 = vadd.f32 %v144, %v228
    %v245 = vadd.f32 %v145, %v229
    %v246 = vadd.f32 %v146, %v230
    %v247 = vld [vmem:[%s2] sm:$0xff]
    %v248 = vld [vmem:[%s2 + $0x8] sm:$0xff]
    %v249 = vld [vmem:[%s2 + $0x10] sm:$0xff]
    %v250 = vld [vmem:[%s2 + $0x18] sm:$0xff]
    %v251 = vld [vmem:[%s2 + $0x20] sm:$0xff]
    %v252 = vld [vmem:[%s2 + $0x28] sm:$0xff]
    %v253 = vld [vmem:[%s2 + $0x30] sm:$0xff]
    %v254 = vld [vmem:[%s2 + $0x38] sm:$0xff]
    %v255 = vld [vmem:[%s2 + $0x40] sm:$0xff]
    %v256 = vld [vmem:[%s2 + $0x48] sm:$0xff]
    %v257 = vld [vmem:[%s2 + $0x50] sm:$0xff]
    %v258 = vld [vmem:[%s2 + $0x58] sm:$0xff]
    %v259 = vld [vmem:[%s2 + $0x60] sm:$0xff]
    %v260 = vld [vmem:[%s2 + $0x68] sm:$0xff]
    %v261 = vld [vmem:[%s2 + $0x70] sm:$0xff]
    %v262 = vld [vmem:[%s2 + $0x78] sm:$0xff]
    %264 = vset.pattern.permute.xlu0 0
    %265 = vperm.xlu0 %264, %v247
    %v266 = vpop.permute.xlu0 %265
    %269 = vset.pattern.permute.xlu0 0
    %270 = vperm.xlu0 %269, %v248
    %v271 = vpop.permute.xlu0 %270
    %274 = vset.pattern.permute.xlu0 0
    %275 = vperm.xlu0 %274, %v249
    %v276 = vpop.permute.xlu0 %275
    %279 = vset.pattern.permute.xlu0 0
    %280 = vperm.xlu0 %279, %v250
    %v281 = vpop.permute.xlu0 %280
    %284 = vset.pattern.permute.xlu0 0
    %285 = vperm.xlu0 %284, %v251
    %v286 = vpop.permute.xlu0 %285
    %289 = vset.pattern.permute.xlu0 0
    %290 = vperm.xlu0 %289, %v252
    %v291 = vpop.permute.xlu0 %290
    %294 = vset.pattern.permute.xlu0 0
    %295 = vperm.xlu0 %294, %v253
    %v296 = vpop.permute.xlu0 %295
    %299 = vset.pattern.permute.xlu0 0
    %300 = vperm.xlu0 %299, %v254
    %v301 = vpop.permute.xlu0 %300
    %304 = vset.pattern.permute.xlu0 0
    %305 = vperm.xlu0 %304, %v255
    %v306 = vpop.permute.xlu0 %305
    %309 = vset.pattern.permute.xlu0 0
    %310 = vperm.xlu0 %309, %v256
    %v311 = vpop.permute.xlu0 %310
    %314 = vset.pattern.permute.xlu0 0
    %315 = vperm.xlu0 %314, %v257
    %v316 = vpop.permute.xlu0 %315
    %319 = vset.pattern.permute.xlu0 0
    %320 = vperm.xlu0 %319, %v258
    %v321 = vpop.permute.xlu0 %320
    %324 = vset.pattern.permute.xlu0 0
    %325 = vperm.xlu0 %324, %v259
    %v326 = vpop.permute.xlu0 %325
    %329 = vset.pattern.permute.xlu0 0
    %330 = vperm.xlu0 %329, %v260
    %v331 = vpop.permute.xlu0 %330
    %334 = vset.pattern.permute.xlu0 0
    %335 = vperm.xlu0 %334, %v261
    %v336 = vpop.permute.xlu0 %335
    %339 = vset.pattern.permute.xlu0 0
    %340 = vperm.xlu0 %339, %v262
    %v341 = vpop.permute.xlu0 %340
    %v343 = vadd.f32 %v231, %v266
    %v344 = vadd.f32 %v232, %v271
    %v345 = vadd.f32 %v233, %v276
    %v346 = vadd.f32 %v234, %v281
    %v347 = vadd.f32 %v235, %v286
    %v348 = vadd.f32 %v236, %v291
    %v349 = vadd.f32 %v237, %v296
    %v350 = vadd.f32 %v238, %v301
    %v351 = vadd.f32 %v239, %v306
    %v352 = vadd.f32 %v240, %v311
    %v353 = vadd.f32 %v241, %v316
    %v354 = vadd.f32 %v242, %v321
    %v355 = vadd.f32 %v243, %v326
    %v356 = vadd.f32 %v244, %v331
    %v357 = vadd.f32 %v245, %v336
    %v358 = vadd.f32 %v246, %v341
    %v359 = vmul.f32 %v343, 0.2
    %v360 = vmul.f32 %v344, 0.2
    %v361 = vmul.f32 %v345, 0.2
    %v362 = vmul.f32 %v346, 0.2
    %v363 = vmul.f32 %v347, 0.2
    %v364 = vmul.f32 %v348, 0.2
    %v365 = vmul.f32 %v349, 0.2
    %v366 = vmul.f32 %v350, 0.2
    %v367 = vmul.f32 %v351, 0.2
    %v368 = vmul.f32 %v352, 0.2
    %v369 = vmul.f32 %v353, 0.2
    %v370 = vmul.f32 %v354, 0.2
    %v371 = vmul.f32 %v355, 0.2
    %v372 = vmul.f32 %v356, 0.2
    %v373 = vmul.f32 %v357, 0.2
    %v374 = vmul.f32 %v358, 0.2
    %v375 = vmax.f32 %v343, %v359
    %v376 = vmax.f32 %v344, %v360
    %v377 = vmax.f32 %v345, %v361
    %v378 = vmax.f32 %v346, %v362
    %v379 = vmax.f32 %v347, %v363
    %v380 = vmax.f32 %v348, %v364
    %v381 = vmax.f32 %v349, %v365
    %v382 = vmax.f32 %v350, %v366
    %v383 = vmax.f32 %v351, %v367
    %v384 = vmax.f32 %v352, %v368
    %v385 = vmax.f32 %v353, %v369
    %v386 = vmax.f32 %v354, %v370
    %v387 = vmax.f32 %v355, %v371
    %v388 = vmax.f32 %v356, %v372
    %v389 = vmax.f32 %v357, %v373
    %v390 = vmax.f32 %v358, %v374
    %v391 = vld [vmem:[%s3] sm:$0xf]
    %v392 = vld [vmem:[%s3 + $0x4] sm:$0xf]
    %v393 = vld [vmem:[%s3 + $0x8] sm:$0xf]
    %v394 = vld [vmem:[%s3 + $0xc] sm:$0xf]
    %v395 = vld [vmem:[%s3 + $0x10] sm:$0xf]
    %v396 = vld [vmem:[%s3 + $0x14] sm:$0xf]
    %v397 = vld [vmem:[%s3 + $0x18] sm:$0xf]
    %v398 = vld [vmem:[%s3 + $0x1c] sm:$0xf]
    %v399 = vld [vmem:[%s3 + $0x20] sm:$0xf]
    %v400 = vld [vmem:[%s3 + $0x24] sm:$0xf]
    %v401 = vld [vmem:[%s3 + $0x28] sm:$0xf]
    %v402 = vld [vmem:[%s3 + $0x2c] sm:$0xf]
    %v403 = vld [vmem:[%s3 + $0x30] sm:$0xf]
    %v404 = vld [vmem:[%s3 + $0x34] sm:$0xf]
    %v405 = vld [vmem:[%s3 + $0x38] sm:$0xf]
    %v406 = vld [vmem:[%s3 + $0x3c] sm:$0xf]
    %v407 = vpack.c.bf16 %v376, %v375
    %v408 = vpack.c.bf16 %v378, %v377
    %v409 = vpack.c.bf16 %v380, %v379
    %v410 = vpack.c.bf16 %v382, %v381
    %v411 = vpack.c.bf16 %v384, %v383
    %v412 = vpack.c.bf16 %v386, %v385
    %v413 = vpack.c.bf16 %v388, %v387
    %v414 = vpack.c.bf16 %v390, %v389
    %v415 = vld [vmem:[%s4] sm:$0xff]
    %v416 = vld [vmem:[%s4 + $0x8] sm:$0xff]
    %v417 = vld [vmem:[%s4 + $0x10] sm:$0xff]
    %v418 = vld [vmem:[%s4 + $0x18] sm:$0xff]
    %v419 = vld [vmem:[%s4 + $0x20] sm:$0xff]
    %v420 = vld [vmem:[%s4 + $0x28] sm:$0xff]
    %v421 = vld [vmem:[%s4 + $0x30] sm:$0xff]
    %v422 = vld [vmem:[%s4 + $0x38] sm:$0xff]
    %v423 = vld [vmem:[%s4 + $0x40] sm:$0xff]
    %v424 = vld [vmem:[%s4 + $0x48] sm:$0xff]
    %v425 = vld [vmem:[%s4 + $0x50] sm:$0xff]
    %v426 = vld [vmem:[%s4 + $0x58] sm:$0xff]
    %v427 = vld [vmem:[%s4 + $0x60] sm:$0xff]
    %v428 = vld [vmem:[%s4 + $0x68] sm:$0xff]
    %v429 = vld [vmem:[%s4 + $0x70] sm:$0xff]
    %v430 = vld [vmem:[%s4 + $0x78] sm:$0xff]
    %432 = vset.pattern.permute.xlu0 0
    %433 = vperm.xlu0 %432, %v415
    %v434 = vpop.permute.xlu0 %433
    %437 = vset.pattern.permute.xlu0 0
    %438 = vperm.xlu0 %437, %v416
    %v439 = vpop.permute.xlu0 %438
    %442 = vset.pattern.permute.xlu0 0
    %443 = vperm.xlu0 %442, %v417
    %v444 = vpop.permute.xlu0 %443
    %447 = vset.pattern.permute.xlu0 0
    %448 = vperm.xlu0 %447, %v418
    %v449 = vpop.permute.xlu0 %448
    %452 = vset.pattern.permute.xlu0 0
    %453 = vperm.xlu0 %452, %v419
    %v454 = vpop.permute.xlu0 %453
    %457 = vset.pattern.permute.xlu0 0
    %458 = vperm.xlu0 %457, %v420
    %v459 = vpop.permute.xlu0 %458
    %462 = vset.pattern.permute.xlu0 0
    %463 = vperm.xlu0 %462, %v421
    %v464 = vpop.permute.xlu0 %463
    %467 = vset.pattern.permute.xlu0 0
    %468 = vperm.xlu0 %467, %v422
    %v469 = vpop.permute.xlu0 %468
    %472 = vset.pattern.permute.xlu0 0
    %473 = vperm.xlu0 %472, %v423
    %v474 = vpop.permute.xlu0 %473
    %477 = vset.pattern.permute.xlu0 0
    %478 = vperm.xlu0 %477, %v424
    %v479 = vpop.permute.xlu0 %478
    %482 = vset.pattern.permute.xlu0 0
    %483 = vperm.xlu0 %482, %v425
    %v484 = vpop.permute.xlu0 %483
    %487 = vset.pattern.permute.xlu0 0
    %488 = vperm.xlu0 %487, %v426
    %v489 = vpop.permute.xlu0 %488
    %492 = vset.pattern.permute.xlu0 0
    %493 = vperm.xlu0 %492, %v427
    %v494 = vpop.permute.xlu0 %493
    %497 = vset.pattern.permute.xlu0 0
    %498 = vperm.xlu0 %497, %v428
    %v499 = vpop.permute.xlu0 %498
    %502 = vset.pattern.permute.xlu0 0
    %503 = vperm.xlu0 %502, %v429
    %v504 = vpop.permute.xlu0 %503
    %507 = vset.pattern.permute.xlu0 0
    %508 = vperm.xlu0 %507, %v430
    %v509 = vpop.permute.xlu0 %508
    %v527 = vunpack.c.l.b16 %v391
    %v528 = vunpack.c.l.b16 %v392
    %v529 = vunpack.c.l.b16 %v393
    %v530 = vunpack.c.l.b16 %v394
    %v531 = vunpack.c.l.b16 %v395
    %v532 = vunpack.c.l.b16 %v396
    %v533 = vunpack.c.l.b16 %v397
    %v534 = vunpack.c.l.b16 %v398
    %v535 = vunpack.c.l.b16 %v399
    %v536 = vunpack.c.l.b16 %v400
    %v537 = vunpack.c.l.b16 %v401
    %v538 = vunpack.c.l.b16 %v402
    %v539 = vunpack.c.l.b16 %v403
    %v540 = vunpack.c.l.b16 %v404
    %v541 = vunpack.c.l.b16 %v405
    %v542 = vunpack.c.l.b16 %v406
    %v543 = vpack.c.b16 %v528, %v527
    %v544 = vpack.c.b16 %v530, %v529
    %v545 = vpack.c.b16 %v532, %v531
    %v546 = vpack.c.b16 %v534, %v533
    %v547 = vpack.c.b16 %v536, %v535
    %v548 = vpack.c.b16 %v538, %v537
    %v549 = vpack.c.b16 %v540, %v539
    %v550 = vpack.c.b16 %v542, %v541
    %559 = vmatprep.subr.bf16.mxu0 0
    %560 = vmatpush1.bf16.msra.mxu0 %v407
    %561 = vmatprep.subr.bf16.mxu0 0
    %562 = vmatpush1.bf16.msra.mxu0 %v408
    %563 = vmatprep.subr.bf16.mxu0 0
    %564 = vmatpush1.bf16.msra.mxu0 %v409
    %565 = vmatprep.subr.bf16.mxu0 0
    %566 = vmatpush1.bf16.msra.mxu0 %v410
    %567 = vmatprep.subr.bf16.mxu0 0
    %568 = vmatpush1.bf16.msra.mxu0 %v411
    %569 = vmatprep.subr.bf16.mxu0 0
    %570 = vmatpush1.bf16.msra.mxu0 %v412
    %571 = vmatprep.subr.bf16.mxu0 0
    %572 = vmatpush1.bf16.msra.mxu0 %v413
    %573 = vmatprep.subr.bf16.mxu0 0
    %574 = vmatpush1.bf16.msra.mxu0 %v414
    %575 = vmatprep.subr.bf16.mxu0 0
    %576 = vmatpush1.bf16.msra.mxu0 0
    %577 = vmatprep.subr.bf16.mxu0 0
    %578 = vmatpush1.bf16.msra.mxu0 0
    %579 = vmatprep.subr.bf16.mxu0 0
    %580 = vmatpush1.bf16.msra.mxu0 0
    %581 = vmatprep.subr.bf16.mxu0 0
    %582 = vmatpush1.bf16.msra.mxu0 0
    %583 = vmatprep.subr.bf16.mxu0 0
    %584 = vmatpush1.bf16.msra.mxu0 0
    %585 = vmatprep.subr.bf16.mxu0 0
    %586 = vmatpush1.bf16.msra.mxu0 0
    %587 = vmatprep.subr.bf16.mxu0 0
    %588 = vmatpush1.bf16.msra.mxu0 0
    %589 = vmatprep.subr.bf16.mxu0 0
    %590 = vmatpush1.bf16.msra.mxu0 0
    %591 = vmatprep.mubr.bf16.mxu0 0
    %592 = vmatmul.mubr.bf16.gmra.mrb[0].mxu0 %v543
    %v593 = vpop.f32.mrb[0].mxu0
    %v594 = vadd.f32 %v434, %v593
    %v595 = vpop.f32.mrb[0].mxu0
    %v596 = vpop.f32.mrb[0].mxu0
    %v597 = vadd.f32 %v439, %v596
    %v598 = vpop.f32.mrb[0].mxu0
    %599 = vmatprep.mubr.bf16.mxu0 0
    %600 = vmatmul.mubr.bf16.gmra.mrb[0].mxu0 %v544
    %v601 = vpop.f32.mrb[0].mxu0
    %v602 = vadd.f32 %v444, %v601
    %v603 = vpop.f32.mrb[0].mxu0
    %v604 = vpop.f32.mrb[0].mxu0
    %v605 = vadd.f32 %v449, %v604
    %v606 = vpop.f32.mrb[0].mxu0
    %607 = vmatprep.mubr.bf16.mxu0 0
    %608 = vmatmul.mubr.bf16.gmra.mrb[0].mxu0 %v545
    %v609 = vpop.f32.mrb[0].mxu0
    %v610 = vadd.f32 %v454, %v609
    %v611 = vpop.f32.mrb[0].mxu0
    %v612 = vpop.f32.mrb[0].mxu0
    %v613 = vadd.f32 %v459, %v612
    %v614 = vpop.f32.mrb[0].mxu0
    %615 = vmatprep.mubr.bf16.mxu0 0
    %616 = vmatmul.mubr.bf16.gmra.mrb[0].mxu0 %v546
    %v617 = vpop.f32.mrb[0].mxu0
    %v618 = vadd.f32 %v464, %v617
    %v619 = vpop.f32.mrb[0].mxu0
    %v620 = vpop.f32.mrb[0].mxu0
    %v621 = vadd.f32 %v469, %v620
    %v622 = vpop.f32.mrb[0].mxu0
    %623 = vmatprep.mubr.bf16.mxu0 0
    %624 = vmatmul.mubr.bf16.gmra.mrb[0].mxu0 %v547
    %v625 = vpop.f32.mrb[0].mxu0
    %v626 = vadd.f32 %v474, %v625
    %v627 = vpop.f32.mrb[0].mxu0
    %v628 = vpop.f32.mrb[0].mxu0
    %v629 = vadd.f32 %v479, %v628
    %v630 = vpop.f32.mrb[0].mxu0
    %631 = vmatprep.mubr.bf16.mxu0 0
    %632 = vmatmul.mubr.bf16.gmra.mrb[0].mxu0 %v548
    %v633 = vpop.f32.mrb[0].mxu0
    %v634 = vadd.f32 %v484, %v633
    %v635 = vpop.f32.mrb[0].mxu0
    %v636 = vpop.f32.mrb[0].mxu0
    %v637 = vadd.f32 %v489, %v636
    %v638 = vpop.f32.mrb[0].mxu0
    %639 = vmatprep.mubr.bf16.mxu0 0
    %640 = vmatmul.mubr.bf16.gmra.mrb[0].mxu0 %v549
    %v641 = vpop.f32.mrb[0].mxu0
    %v642 = vadd.f32 %v494, %v641
    %v643 = vpop.f32.mrb[0].mxu0
    %v644 = vpop.f32.mrb[0].mxu0
    %v645 = vadd.f32 %v499, %v644
    %v646 = vpop.f32.mrb[0].mxu0
    %647 = vmatprep.mubr.bf16.mxu0 0
    %648 = vmatmul.mubr.bf16.gmra.mrb[0].mxu0 %v550
    %v649 = vpop.f32.mrb[0].mxu0
    %v650 = vadd.f32 %v504, %v649
    %v651 = vpop.f32.mrb[0].mxu0
    %v652 = vpop.f32.mrb[0].mxu0
    %v653 = vadd.f32 %v509, %v652
    %v654 = vpop.f32.mrb[0].mxu0
    %655 = vdwg.mxu0
    %v656 = vmul.f32 %v594, 0.2
    %v657 = vmul.f32 %v597, 0.2
    %v658 = vmul.f32 %v602, 0.2
    %v659 = vmul.f32 %v605, 0.2
    %v660 = vmul.f32 %v610, 0.2
    %v661 = vmul.f32 %v613, 0.2
    %v662 = vmul.f32 %v618, 0.2
    %v663 = vmul.f32 %v621, 0.2
    %v664 = vmul.f32 %v626, 0.2
    %v665 = vmul.f32 %v629, 0.2
    %v666 = vmul.f32 %v634, 0.2
    %v667 = vmul.f32 %v637, 0.2
    %v668 = vmul.f32 %v642, 0.2
    %v669 = vmul.f32 %v645, 0.2
    %v670 = vmul.f32 %v650, 0.2
    %v671 = vmul.f32 %v653, 0.2
    %v672 = vmax.f32 %v594, %v656
    %v673 = vmax.f32 %v597, %v657
    %v674 = vmax.f32 %v602, %v658
    %v675 = vmax.f32 %v605, %v659
    %v676 = vmax.f32 %v610, %v660
    %v677 = vmax.f32 %v613, %v661
    %v678 = vmax.f32 %v618, %v662
    %v679 = vmax.f32 %v621, %v663
    %v680 = vmax.f32 %v626, %v664
    %v681 = vmax.f32 %v629, %v665
    %v682 = vmax.f32 %v634, %v666
    %v683 = vmax.f32 %v637, %v667
    %v684 = vmax.f32 %v642, %v668
    %v685 = vmax.f32 %v645, %v669
    %v686 = vmax.f32 %v650, %v670
    %v687 = vmax.f32 %v653, %v671
    %v688 = vld [vmem:[%s5] sm:$0x1]
    %v689 = vpack.c.bf16 %v673, %v672
    %v690 = vpack.c.bf16 %v675, %v674
    %v691 = vpack.c.bf16 %v677, %v676
    %v692 = vpack.c.bf16 %v679, %v678
    %v693 = vpack.c.bf16 %v681, %v680
    %v694 = vpack.c.bf16 %v683, %v682
    %v695 = vpack.c.bf16 %v685, %v684
    %v696 = vpack.c.bf16 %v687, %v686
    %v697 = vld [vmem:[#allocation2] sm:$0x1]
    %699 = vset.pattern.permute.xlu0 0
    %700 = vperm.xlu0 %699, %v697
    %v701 = vpop.permute.xlu0 %700
    %v703 = vlaneseq
    %v704 = vshrl.u32 %v703, 7
    %v705 = vsub.s32 0, %v704
    %v706 = vrot.slane %v701, %v705
    %707 = vmatprep.subr.bf16.mxu0 0
    %708 = vmatpush1.bf16.msra.mxu0 %v689
    %709 = vmatprep.subr.bf16.mxu0 0
    %710 = vmatpush1.bf16.msra.mxu0 %v690
    %711 = vmatprep.subr.bf16.mxu0 0
    %712 = vmatpush1.bf16.msra.mxu0 %v691
    %713 = vmatprep.subr.bf16.mxu0 0
    %714 = vmatpush1.bf16.msra.mxu0 %v692
    %715 = vmatprep.subr.bf16.mxu0 0
    %716 = vmatpush1.bf16.msra.mxu0 %v693
    %717 = vmatprep.subr.bf16.mxu0 0
    %718 = vmatpush1.bf16.msra.mxu0 %v694
    %719 = vmatprep.subr.bf16.mxu0 0
    %720 = vmatpush1.bf16.msra.mxu0 %v695
    %721 = vmatprep.subr.bf16.mxu0 0
    %722 = vmatpush1.bf16.msra.mxu0 %v696
    %723 = vmatprep.subr.bf16.mxu0 0
    %724 = vmatpush1.bf16.msra.mxu0 0
    %725 = vmatprep.subr.bf16.mxu0 0
    %726 = vmatpush1.bf16.msra.mxu0 0
    %727 = vmatprep.subr.bf16.mxu0 0
    %728 = vmatpush1.bf16.msra.mxu0 0
    %729 = vmatprep.subr.bf16.mxu0 0
    %730 = vmatpush1.bf16.msra.mxu0 0
    %731 = vmatprep.subr.bf16.mxu0 0
    %732 = vmatpush1.bf16.msra.mxu0 0
    %733 = vmatprep.subr.bf16.mxu0 0
    %734 = vmatpush1.bf16.msra.mxu0 0
    %735 = vmatprep.subr.bf16.mxu0 0
    %736 = vmatpush1.bf16.msra.mxu0 0
    %737 = vmatprep.subr.bf16.mxu0 0
    %738 = vmatpush1.bf16.msra.mxu0 0
    %739 = vmatprep.mubr.bf16.mxu0 0
    %740 = vmatmul.mubr.bf16.gmra.mrb[0].mxu0 %v688
    %v741 = vpop.f32.mrb[0].mxu0
    %v742 = vadd.f32 %v706, %v741
    %v743 = vpop.f32.mrb[0].mxu0
    %v744 = vpop.f32.mrb[0].mxu0
    %v745 = vpop.f32.mrb[0].mxu0
    %746 = vdwg.mxu0
    %v747 = vmul.f32 %v742, 0.2
    %v748 = vmax.f32 %v742, %v747
    %v749 = vxor.u32 %v748, 2147483648
    %v750 = vmul.f32 %v749, 1.442695
    %v751 = vpow.pop %v750
    %v752 = vadd.f32 %v751, 1.0
    %v753 = vrcp.pop %v752
    %v754 = vmul.f32 1.0, %v753
    %755 = vst [vmem:[#allocation3] sm:$0x1] %v754
    // Predicated region
    $region30: #{tpu_custom_call.1} parent=1 // pred_check
      _
    $region31: #{tpu_custom_call.1} parent=1 // pred_check_branch
      %757 = sbr.rel (0) target = $region33
    $region32: #{tpu_custom_call.1} parent=1 // pred_region
      %s759 = ssub.s32 16, 16
      %760 = vsyncadd [#allocation4], %s759
      %s762 = sshll.u32 [#allocation3], 4
      %s763 = int_to_ptr.vmem [resolvable:$true] %s762
      %765 = dma.vmem_to_hbm [thread:$0]  %s763, 16, %s7, [#allocation4]
    $region33: #{tpu_custom_call.1} parent=1 // pred_fallthru
      _
    // Predicated region
    $region34: #{tpu_custom_call.1} parent=1 // pred_check
      _
    $region35: #{tpu_custom_call.1} parent=1 // pred_check_branch
      %767 = sbr.rel (0) target = $region37
    $region36: #{tpu_custom_call.1} parent=1 // pred_region
      %768 = dma.done [#allocation4], 16
    $region37: #{tpu_custom_call.1} parent=1 // pred_fallthru
      _
    %769 = vsyncpa [#allocation4], 1

</llo_original>
